<compile_context>
chip_gen: v7x
topology: tpu7x:2x2x1
jax: 0.10.0
libtpu: 0.0.40
codegen_flags: <defaults>
</compile_context>

<pallas_src>
import jax
import jax.numpy as jnp
from jax.experimental import pallas as pl
from jax.experimental.pallas import tpu as pltpu


# ----------------------------------------------------------------------------
# Fused kernel: relu -> 1x1 ConvTranspose (channel mix) -> 2x nearest upsample
#   x_ref   : (1, Cin, TH, W)       VMEM  (one batch element, TH input rows)
#   w_ref   : (Cin, Cout)           SMEM  (scalar weight reads)
#   upw_ref : (W, 2W)               VMEM  (0/1 width-duplication matrix, resident)
#   o_ref   : (1, Cout, TH, 4W)     VMEM  (flat view of (1, Cout, 2TH, 2W))
# ----------------------------------------------------------------------------
def _transition_kernel(x_ref, w_ref, upw_ref, o_ref):
    _, Cin, TH, W = x_ref.shape
    _, Cout, _, _ = o_ref.shape

    # 1x1 ConvTranspose == per-pixel channel mix. Channel counts of this block are
    # tiny (e.g. 4 -> 4), so it is an unrolled scalar(SMEM) x vector MAC chain on
    # the VPU, with the ReLU folded in (redundant relu is cheap VPU filler that
    # hides under the DMA; avoids materializing Cin full tiles).
    accs = []
    for co in range(Cout):
        acc = w_ref[0, co] * jnp.maximum(x_ref[0, 0].astype(jnp.float32), 0.0)
        for ci in range(1, Cin):
            acc = acc + w_ref[ci, co] * jnp.maximum(
                x_ref[0, ci].astype(jnp.float32), 0.0)
        accs.append(acc)
    acc_all = jnp.concatenate(accs, axis=0)                      # (Cout*TH, W)

    # Width 2x nearest upsample: single batched matmul against the grid-invariant
    # 0/1 duplication matrix (MXU; bf16 operands when the output is bf16 -- exact).
    wide = jnp.dot(acc_all.astype(upw_ref.dtype), upw_ref[...],
                   preferred_element_type=jnp.float32)           # (Cout*TH, 2W)
    wide = wide.astype(o_ref.dtype)

    # Height 2x nearest upsample: zero-FLOP. Flat output row r == [row_2r | row_2r+1]
    # of the (2TH, 2W) image, and both equal wide[r], so it is a lane concat.
    for co in range(Cout):
        wide_co = wide[co * TH:(co + 1) * TH, :]                 # static, tile-aligned
        o_ref[0, co] = jnp.concatenate([wide_co, wide_co], axis=-1)   # (TH, 4W)


# ----------------------------------------------------------------------------
# Tile-height picker: budgets input + output blocks + f32 temps with double
# buffering, keeps the (8,128) block rule, and guarantees enough grid steps.
# ----------------------------------------------------------------------------
def _pick_tile_h(N, H, W, Cin, Cout, x_itemsize, out_itemsize,
                 budget_bytes=24 << 20, target_steps=8):
    cands = sorted({H} | {t for t in range(8, H + 1, 8) if H % t == 0},
                   reverse=True)

    def footprint(th):
        in_blk = Cin * th * W * x_itemsize
        out_blk = Cout * th * 4 * W * out_itemsize
        upw = W * 2 * W * 4
        temps = (2 * Cout * th * W * 4          # per-co accs + concatenated acc_all
                 + Cout * th * 2 * W * 4        # wide
                 + Cout * th * 4 * W * 4)       # concat result before store
        return 2 * (in_blk + out_blk) + upw + temps   # 2x: double-buffered blocks

    fits = [t for t in cands if footprint(t) <= budget_bytes] or [cands[-1]]
    good = [t for t in fits if N * (H // t) >= target_steps]
    return max(good) if good else min(fits)


# ----------------------------------------------------------------------------
# Module wrapper
# ----------------------------------------------------------------------------
def transition_block_dy1(x_nchw, w, *, tile_h=None):
    """x_nchw: (N, Cin, H, W); w: (Cin, Cout) == ConvTranspose2d.weight[:, :, 0, 0].

    Returns (N, Cout, 2H, 2W) in NCHW, same dtype as x.
    """
    N, Cin, H, W = x_nchw.shape
    Cin_w, Cout = w.shape
    assert Cin_w == Cin, (Cin_w, Cin)

    out_dtype = x_nchw.dtype
    x_itemsize = jnp.dtype(x_nchw.dtype).itemsize
    out_itemsize = jnp.dtype(out_dtype).itemsize

    if tile_h is None:
        tile_h = _pick_tile_h(N, H, W, Cin, Cout, x_itemsize, out_itemsize)
    assert H % tile_h == 0, (H, tile_h)
    assert tile_h % 8 == 0 or tile_h == H, (H, tile_h)

    # Weights as f32 scalars in SMEM (tiny); accumulation is in f32.
    w_f32 = w.astype(jnp.float32)

    # Grid-invariant 0/1 width-duplication matrix: up_w[c, j] = 1 iff j // 2 == c.
    # bf16 operands when output is bf16 (exact selection); f32 otherwise.
    mm_dtype = jnp.bfloat16 if out_dtype == jnp.bfloat16 else jnp.float32
    up_w = (jnp.arange(2 * W)[None, :] // 2 == jnp.arange(W)[:, None]).astype(mm_dtype)

    flops = (2 * N * Cout * Cin * H * W            # channel mix MACs
             + 2 * N * Cout * H * W * (2 * W))     # width-duplication matmul
    bytes_accessed = (N * Cin * H * W * x_itemsize
                      + Cin * Cout * 4
                      + W * 2 * W * jnp.dtype(mm_dtype).itemsize
                      + N * Cout * 4 * H * W * out_itemsize)

    out_flat = pl.pallas_call(
        _transition_kernel,
        # Flat layout (N, Cout, H, 4W) is byte-identical to (N, Cout, 2H, 2W).
        out_shape=jax.ShapeDtypeStruct((N, Cout, H, 4 * W), out_dtype),
        grid_spec=pltpu.PrefetchScalarGridSpec(
            num_scalar_prefetch=0,
            grid=(N, H // tile_h),
            in_specs=[
                pl.BlockSpec((1, Cin, tile_h, W), lambda n, r: (n, 0, r, 0)),
                pl.BlockSpec(memory_space=pltpu.MemorySpace.SMEM),
                pl.BlockSpec((W, 2 * W), lambda n, r: (0, 0)),   # resident, no re-DMA
            ],
            out_specs=pl.BlockSpec((1, Cout, tile_h, 4 * W),
                                   lambda n, r: (n, 0, r, 0)),
        ),
        compiler_params=pltpu.CompilerParams(
            dimension_semantics=("parallel", "parallel"),
            vmem_limit_bytes=32 * 1024 * 1024),
        cost_estimate=pl.CostEstimate(flops=flops, transcendentals=0,
                                      bytes_accessed=bytes_accessed),
    )(x_nchw, w_f32, up_w)

    # Free (metadata-only) reshape: contiguous row-major (H, 4W) -> (2H, 2W).
    return out_flat.reshape(N, Cout, 2 * H, 2 * W)


# ----------------------------------------------------------------------------
# Pure-JAX reference (for correctness check)
# ----------------------------------------------------------------------------
def reference(x_nchw, w):
    # ConvTranspose2d(k=1, s=1, p=0, bias=False): weight is (Cin, Cout, 1, 1)
    # => out[n, o, h, w] = sum_i relu(x)[n, i, h, w] * w[i, o]
    y = jnp.einsum("nihw,io->nohw",
                   jnp.maximum(x_nchw.astype(jnp.float32), 0.0),
                   w.astype(jnp.float32))
    # F.upsample_nearest(scale_factor=2): out[..., r, c] = y[..., r // 2, c // 2]
    return jnp.repeat(jnp.repeat(y, 2, axis=2), 2, axis=3).astype(x_nchw.dtype)


if __name__ == "__main__":
    # Small shapes consistent with the module: in_planes=4, out_planes=4.
    N, Cin, H, W = 2, 4, 16, 16
    Cout = 4

    key = jax.random.PRNGKey(0)
    kx, kw = jax.random.split(key)
    x = jax.random.normal(kx, (N, Cin, H, W), dtype=jnp.float32)
    # Deterministic synthetic ConvTranspose2d weight (in_planes, out_planes).
    w = jax.random.normal(kw, (Cin, Cout), dtype=jnp.float32) * 0.25

    out = jax.block_until_ready(transition_block_dy1(x, w))
    ref = jax.block_until_ready(reference(x, w))

    assert out.shape == (N, Cout, 2 * H, 2 * W), out.shape
    assert jnp.allclose(out, ref, atol=1e-4, rtol=1e-4), \
        float(jnp.max(jnp.abs(out - ref)))

    print("KERNEL_OK")
</pallas_src>

<mosaic_0001>
module attributes {stable_mosaic.version = 11 : i64} {
  func.func @_transition_kernel(%arg0: i32, %arg1: i32, %arg2: memref<1x4x8x16xf32, #tpu.memory_space<vmem>>, %arg3: memref<4x4xf32, #tpu.memory_space<smem>>, %arg4: memref<16x32xf32, #tpu.memory_space<vmem>>, %arg5: memref<1x4x8x64xf32, #tpu.memory_space<vmem>>) attributes {dimension_semantics = [#tpu.dimension_semantics<parallel>, #tpu.dimension_semantics<parallel>], iteration_bounds = array<i64: 2, 2>, scalar_prefetch = 0 : i64, scratch_operands = 0 : i64, tpu.core_type = #tpu.core_type<tc>, window_params = [{transform_indices = @transform_0, window_bounds = array<i64: 1, 4, 8, 16>}, {transform_indices = @transform_1, window_bounds = array<i64: 4, 4>}, {pipeline_mode = #tpu.pipeline_mode<synchronous>, transform_indices = @transform_2, window_bounds = array<i64: 16, 32>}, {transform_indices = @transform_3, window_bounds = array<i64: 1, 4, 8, 64>}]} {
    %c0 = arith.constant 0 : index
    %c0_0 = arith.constant 0 : index
    %0 = memref.load %arg3[%c0, %c0_0] : memref<4x4xf32, #tpu.memory_space<smem>>
    %c0_1 = arith.constant 0 : index
    %c0_2 = arith.constant 0 : index
    %c0_3 = arith.constant 0 : index
    %c0_4 = arith.constant 0 : index
    %1 = vector.load %arg2[%c0_1, %c0_2, %c0_3, %c0_4] : memref<1x4x8x16xf32, #tpu.memory_space<vmem>>, vector<1x1x8x16xf32>
    %2 = vector.shape_cast %1 : vector<1x1x8x16xf32> to vector<8x16xf32>
    %cst = arith.constant 0.000000e+00 : f32
    %3 = vector.broadcast %cst : f32 to vector<8x16xf32>
    %4 = arith.maximumf %2, %3 : vector<8x16xf32>
    %5 = vector.broadcast %0 : f32 to vector<8x16xf32>
    %6 = arith.mulf %5, %4 : vector<8x16xf32>
    %c1 = arith.constant 1 : index
    %c0_5 = arith.constant 0 : index
    %7 = memref.load %arg3[%c1, %c0_5] : memref<4x4xf32, #tpu.memory_space<smem>>
    %c0_6 = arith.constant 0 : index
    %c1_7 = arith.constant 1 : index
    %c0_8 = arith.constant 0 : index
    %c0_9 = arith.constant 0 : index
    %8 = vector.load %arg2[%c0_6, %c1_7, %c0_8, %c0_9] : memref<1x4x8x16xf32, #tpu.memory_space<vmem>>, vector<1x1x8x16xf32>
    %9 = vector.shape_cast %8 : vector<1x1x8x16xf32> to vector<8x16xf32>
    %cst_10 = arith.constant 0.000000e+00 : f32
    %10 = vector.broadcast %cst_10 : f32 to vector<8x16xf32>
    %11 = arith.maximumf %9, %10 : vector<8x16xf32>
    %12 = vector.broadcast %7 : f32 to vector<8x16xf32>
    %13 = arith.mulf %12, %11 : vector<8x16xf32>
    %14 = arith.addf %6, %13 : vector<8x16xf32>
    %c2 = arith.constant 2 : index
    %c0_11 = arith.constant 0 : index
    %15 = memref.load %arg3[%c2, %c0_11] : memref<4x4xf32, #tpu.memory_space<smem>>
    %c0_12 = arith.constant 0 : index
    %c2_13 = arith.constant 2 : index
    %c0_14 = arith.constant 0 : index
    %c0_15 = arith.constant 0 : index
    %16 = vector.load %arg2[%c0_12, %c2_13, %c0_14, %c0_15] : memref<1x4x8x16xf32, #tpu.memory_space<vmem>>, vector<1x1x8x16xf32>
    %17 = vector.shape_cast %16 : vector<1x1x8x16xf32> to vector<8x16xf32>
    %cst_16 = arith.constant 0.000000e+00 : f32
    %18 = vector.broadcast %cst_16 : f32 to vector<8x16xf32>
    %19 = arith.maximumf %17, %18 : vector<8x16xf32>
    %20 = vector.broadcast %15 : f32 to vector<8x16xf32>
    %21 = arith.mulf %20, %19 : vector<8x16xf32>
    %22 = arith.addf %14, %21 : vector<8x16xf32>
    %c3 = arith.constant 3 : index
    %c0_17 = arith.constant 0 : index
    %23 = memref.load %arg3[%c3, %c0_17] : memref<4x4xf32, #tpu.memory_space<smem>>
    %c0_18 = arith.constant 0 : index
    %c3_19 = arith.constant 3 : index
    %c0_20 = arith.constant 0 : index
    %c0_21 = arith.constant 0 : index
    %24 = vector.load %arg2[%c0_18, %c3_19, %c0_20, %c0_21] : memref<1x4x8x16xf32, #tpu.memory_space<vmem>>, vector<1x1x8x16xf32>
    %25 = vector.shape_cast %24 : vector<1x1x8x16xf32> to vector<8x16xf32>
    %cst_22 = arith.constant 0.000000e+00 : f32
    %26 = vector.broadcast %cst_22 : f32 to vector<8x16xf32>
    %27 = arith.maximumf %25, %26 : vector<8x16xf32>
    %28 = vector.broadcast %23 : f32 to vector<8x16xf32>
    %29 = arith.mulf %28, %27 : vector<8x16xf32>
    %30 = arith.addf %22, %29 : vector<8x16xf32>
    %c0_23 = arith.constant 0 : index
    %c1_24 = arith.constant 1 : index
    %31 = memref.load %arg3[%c0_23, %c1_24] : memref<4x4xf32, #tpu.memory_space<smem>>
    %c0_25 = arith.constant 0 : index
    %c0_26 = arith.constant 0 : index
    %c0_27 = arith.constant 0 : index
    %c0_28 = arith.constant 0 : index
    %32 = vector.load %arg2[%c0_25, %c0_26, %c0_27, %c0_28] : memref<1x4x8x16xf32, #tpu.memory_space<vmem>>, vector<1x1x8x16xf32>
    %33 = vector.shape_cast %32 : vector<1x1x8x16xf32> to vector<8x16xf32>
    %cst_29 = arith.constant 0.000000e+00 : f32
    %34 = vector.broadcast %cst_29 : f32 to vector<8x16xf32>
    %35 = arith.maximumf %33, %34 : vector<8x16xf32>
    %36 = vector.broadcast %31 : f32 to vector<8x16xf32>
    %37 = arith.mulf %36, %35 : vector<8x16xf32>
    %c1_30 = arith.constant 1 : index
    %c1_31 = arith.constant 1 : index
    %38 = memref.load %arg3[%c1_30, %c1_31] : memref<4x4xf32, #tpu.memory_space<smem>>
    %c0_32 = arith.constant 0 : index
    %c1_33 = arith.constant 1 : index
    %c0_34 = arith.constant 0 : index
    %c0_35 = arith.constant 0 : index
    %39 = vector.load %arg2[%c0_32, %c1_33, %c0_34, %c0_35] : memref<1x4x8x16xf32, #tpu.memory_space<vmem>>, vector<1x1x8x16xf32>
    %40 = vector.shape_cast %39 : vector<1x1x8x16xf32> to vector<8x16xf32>
    %cst_36 = arith.constant 0.000000e+00 : f32
    %41 = vector.broadcast %cst_36 : f32 to vector<8x16xf32>
    %42 = arith.maximumf %40, %41 : vector<8x16xf32>
    %43 = vector.broadcast %38 : f32 to vector<8x16xf32>
    %44 = arith.mulf %43, %42 : vector<8x16xf32>
    %45 = arith.addf %37, %44 : vector<8x16xf32>
    %c2_37 = arith.constant 2 : index
    %c1_38 = arith.constant 1 : index
    %46 = memref.load %arg3[%c2_37, %c1_38] : memref<4x4xf32, #tpu.memory_space<smem>>
    %c0_39 = arith.constant 0 : index
    %c2_40 = arith.constant 2 : index
    %c0_41 = arith.constant 0 : index
    %c0_42 = arith.constant 0 : index
    %47 = vector.load %arg2[%c0_39, %c2_40, %c0_41, %c0_42] : memref<1x4x8x16xf32, #tpu.memory_space<vmem>>, vector<1x1x8x16xf32>
    %48 = vector.shape_cast %47 : vector<1x1x8x16xf32> to vector<8x16xf32>
    %cst_43 = arith.constant 0.000000e+00 : f32
    %49 = vector.broadcast %cst_43 : f32 to vector<8x16xf32>
    %50 = arith.maximumf %48, %49 : vector<8x16xf32>
    %51 = vector.broadcast %46 : f32 to vector<8x16xf32>
    %52 = arith.mulf %51, %50 : vector<8x16xf32>
    %53 = arith.addf %45, %52 : vector<8x16xf32>
    %c3_44 = arith.constant 3 : index
    %c1_45 = arith.constant 1 : index
    %54 = memref.load %arg3[%c3_44, %c1_45] : memref<4x4xf32, #tpu.memory_space<smem>>
    %c0_46 = arith.constant 0 : index
    %c3_47 = arith.constant 3 : index
    %c0_48 = arith.constant 0 : index
    %c0_49 = arith.constant 0 : index
    %55 = vector.load %arg2[%c0_46, %c3_47, %c0_48, %c0_49] : memref<1x4x8x16xf32, #tpu.memory_space<vmem>>, vector<1x1x8x16xf32>
    %56 = vector.shape_cast %55 : vector<1x1x8x16xf32> to vector<8x16xf32>
    %cst_50 = arith.constant 0.000000e+00 : f32
    %57 = vector.broadcast %cst_50 : f32 to vector<8x16xf32>
    %58 = arith.maximumf %56, %57 : vector<8x16xf32>
    %59 = vector.broadcast %54 : f32 to vector<8x16xf32>
    %60 = arith.mulf %59, %58 : vector<8x16xf32>
    %61 = arith.addf %53, %60 : vector<8x16xf32>
    %c0_51 = arith.constant 0 : index
    %c2_52 = arith.constant 2 : index
    %62 = memref.load %arg3[%c0_51, %c2_52] : memref<4x4xf32, #tpu.memory_space<smem>>
    %c0_53 = arith.constant 0 : index
    %c0_54 = arith.constant 0 : index
    %c0_55 = arith.constant 0 : index
    %c0_56 = arith.constant 0 : index
    %63 = vector.load %arg2[%c0_53, %c0_54, %c0_55, %c0_56] : memref<1x4x8x16xf32, #tpu.memory_space<vmem>>, vector<1x1x8x16xf32>
    %64 = vector.shape_cast %63 : vector<1x1x8x16xf32> to vector<8x16xf32>
    %cst_57 = arith.constant 0.000000e+00 : f32
    %65 = vector.broadcast %cst_57 : f32 to vector<8x16xf32>
    %66 = arith.maximumf %64, %65 : vector<8x16xf32>
    %67 = vector.broadcast %62 : f32 to vector<8x16xf32>
    %68 = arith.mulf %67, %66 : vector<8x16xf32>
    %c1_58 = arith.constant 1 : index
    %c2_59 = arith.constant 2 : index
    %69 = memref.load %arg3[%c1_58, %c2_59] : memref<4x4xf32, #tpu.memory_space<smem>>
    %c0_60 = arith.constant 0 : index
    %c1_61 = arith.constant 1 : index
    %c0_62 = arith.constant 0 : index
    %c0_63 = arith.constant 0 : index
    %70 = vector.load %arg2[%c0_60, %c1_61, %c0_62, %c0_63] : memref<1x4x8x16xf32, #tpu.memory_space<vmem>>, vector<1x1x8x16xf32>
    %71 = vector.shape_cast %70 : vector<1x1x8x16xf32> to vector<8x16xf32>
    %cst_64 = arith.constant 0.000000e+00 : f32
    %72 = vector.broadcast %cst_64 : f32 to vector<8x16xf32>
    %73 = arith.maximumf %71, %72 : vector<8x16xf32>
    %74 = vector.broadcast %69 : f32 to vector<8x16xf32>
    %75 = arith.mulf %74, %73 : vector<8x16xf32>
    %76 = arith.addf %68, %75 : vector<8x16xf32>
    %c2_65 = arith.constant 2 : index
    %c2_66 = arith.constant 2 : index
    %77 = memref.load %arg3[%c2_65, %c2_66] : memref<4x4xf32, #tpu.memory_space<smem>>
    %c0_67 = arith.constant 0 : index
    %c2_68 = arith.constant 2 : index
    %c0_69 = arith.constant 0 : index
    %c0_70 = arith.constant 0 : index
    %78 = vector.load %arg2[%c0_67, %c2_68, %c0_69, %c0_70] : memref<1x4x8x16xf32, #tpu.memory_space<vmem>>, vector<1x1x8x16xf32>
    %79 = vector.shape_cast %78 : vector<1x1x8x16xf32> to vector<8x16xf32>
    %cst_71 = arith.constant 0.000000e+00 : f32
    %80 = vector.broadcast %cst_71 : f32 to vector<8x16xf32>
    %81 = arith.maximumf %79, %80 : vector<8x16xf32>
    %82 = vector.broadcast %77 : f32 to vector<8x16xf32>
    %83 = arith.mulf %82, %81 : vector<8x16xf32>
    %84 = arith.addf %76, %83 : vector<8x16xf32>
    %c3_72 = arith.constant 3 : index
    %c2_73 = arith.constant 2 : index
    %85 = memref.load %arg3[%c3_72, %c2_73] : memref<4x4xf32, #tpu.memory_space<smem>>
    %c0_74 = arith.constant 0 : index
    %c3_75 = arith.constant 3 : index
    %c0_76 = arith.constant 0 : index
    %c0_77 = arith.constant 0 : index
    %86 = vector.load %arg2[%c0_74, %c3_75, %c0_76, %c0_77] : memref<1x4x8x16xf32, #tpu.memory_space<vmem>>, vector<1x1x8x16xf32>
    %87 = vector.shape_cast %86 : vector<1x1x8x16xf32> to vector<8x16xf32>
    %cst_78 = arith.constant 0.000000e+00 : f32
    %88 = vector.broadcast %cst_78 : f32 to vector<8x16xf32>
    %89 = arith.maximumf %87, %88 : vector<8x16xf32>
    %90 = vector.broadcast %85 : f32 to vector<8x16xf32>
    %91 = arith.mulf %90, %89 : vector<8x16xf32>
    %92 = arith.addf %84, %91 : vector<8x16xf32>
    %c0_79 = arith.constant 0 : index
    %c3_80 = arith.constant 3 : index
    %93 = memref.load %arg3[%c0_79, %c3_80] : memref<4x4xf32, #tpu.memory_space<smem>>
    %c0_81 = arith.constant 0 : index
    %c0_82 = arith.constant 0 : index
    %c0_83 = arith.constant 0 : index
    %c0_84 = arith.constant 0 : index
    %94 = vector.load %arg2[%c0_81, %c0_82, %c0_83, %c0_84] : memref<1x4x8x16xf32, #tpu.memory_space<vmem>>, vector<1x1x8x16xf32>
    %95 = vector.shape_cast %94 : vector<1x1x8x16xf32> to vector<8x16xf32>
    %cst_85 = arith.constant 0.000000e+00 : f32
    %96 = vector.broadcast %cst_85 : f32 to vector<8x16xf32>
    %97 = arith.maximumf %95, %96 : vector<8x16xf32>
    %98 = vector.broadcast %93 : f32 to vector<8x16xf32>
    %99 = arith.mulf %98, %97 : vector<8x16xf32>
    %c1_86 = arith.constant 1 : index
    %c3_87 = arith.constant 3 : index
    %100 = memref.load %arg3[%c1_86, %c3_87] : memref<4x4xf32, #tpu.memory_space<smem>>
    %c0_88 = arith.constant 0 : index
    %c1_89 = arith.constant 1 : index
    %c0_90 = arith.constant 0 : index
    %c0_91 = arith.constant 0 : index
    %101 = vector.load %arg2[%c0_88, %c1_89, %c0_90, %c0_91] : memref<1x4x8x16xf32, #tpu.memory_space<vmem>>, vector<1x1x8x16xf32>
    %102 = vector.shape_cast %101 : vector<1x1x8x16xf32> to vector<8x16xf32>
    %cst_92 = arith.constant 0.000000e+00 : f32
    %103 = vector.broadcast %cst_92 : f32 to vector<8x16xf32>
    %104 = arith.maximumf %102, %103 : vector<8x16xf32>
    %105 = vector.broadcast %100 : f32 to vector<8x16xf32>
    %106 = arith.mulf %105, %104 : vector<8x16xf32>
    %107 = arith.addf %99, %106 : vector<8x16xf32>
    %c2_93 = arith.constant 2 : index
    %c3_94 = arith.constant 3 : index
    %108 = memref.load %arg3[%c2_93, %c3_94] : memref<4x4xf32, #tpu.memory_space<smem>>
    %c0_95 = arith.constant 0 : index
    %c2_96 = arith.constant 2 : index
    %c0_97 = arith.constant 0 : index
    %c0_98 = arith.constant 0 : index
    %109 = vector.load %arg2[%c0_95, %c2_96, %c0_97, %c0_98] : memref<1x4x8x16xf32, #tpu.memory_space<vmem>>, vector<1x1x8x16xf32>
    %110 = vector.shape_cast %109 : vector<1x1x8x16xf32> to vector<8x16xf32>
    %cst_99 = arith.constant 0.000000e+00 : f32
    %111 = vector.broadcast %cst_99 : f32 to vector<8x16xf32>
    %112 = arith.maximumf %110, %111 : vector<8x16xf32>
    %113 = vector.broadcast %108 : f32 to vector<8x16xf32>
    %114 = arith.mulf %113, %112 : vector<8x16xf32>
    %115 = arith.addf %107, %114 : vector<8x16xf32>
    %c3_100 = arith.constant 3 : index
    %c3_101 = arith.constant 3 : index
    %116 = memref.load %arg3[%c3_100, %c3_101] : memref<4x4xf32, #tpu.memory_space<smem>>
    %c0_102 = arith.constant 0 : index
    %c3_103 = arith.constant 3 : index
    %c0_104 = arith.constant 0 : index
    %c0_105 = arith.constant 0 : index
    %117 = vector.load %arg2[%c0_102, %c3_103, %c0_104, %c0_105] : memref<1x4x8x16xf32, #tpu.memory_space<vmem>>, vector<1x1x8x16xf32>
    %118 = vector.shape_cast %117 : vector<1x1x8x16xf32> to vector<8x16xf32>
    %cst_106 = arith.constant 0.000000e+00 : f32
    %119 = vector.broadcast %cst_106 : f32 to vector<8x16xf32>
    %120 = arith.maximumf %118, %119 : vector<8x16xf32>
    %121 = vector.broadcast %116 : f32 to vector<8x16xf32>
    %122 = arith.mulf %121, %120 : vector<8x16xf32>
    %123 = arith.addf %115, %122 : vector<8x16xf32>
    %124 = tpu.concatenate %30, %61, %92, %123 in 0 : vector<8x16xf32>, vector<8x16xf32>, vector<8x16xf32>, vector<8x16xf32> -> vector<32x16xf32>
    %c0_107 = arith.constant 0 : index
    %c0_108 = arith.constant 0 : index
    %125 = vector.load %arg4[%c0_107, %c0_108] : memref<16x32xf32, #tpu.memory_space<vmem>>, vector<16x32xf32>
    %cst_109 = arith.constant dense<0.000000e+00> : vector<32x32xf32>
    %126 = tpu.matmul %124, %125, %cst_109 {dimension_numbers = #tpu.dot_dimension_numbers<[1], [0], [0], [1], [0, 0, 1, 1], [], []>} : vector<32x16xf32>, vector<16x32xf32>, vector<32x32xf32> -> vector<32x32xf32>
    %127 = vector.extract_strided_slice %126 {offsets = [0, 0], sizes = [8, 32], strides = [1, 1]} : vector<32x32xf32> to vector<8x32xf32>
    %128 = tpu.concatenate %127, %127 in 1 : vector<8x32xf32>, vector<8x32xf32> -> vector<8x64xf32>
    %c0_110 = arith.constant 0 : index
    %c0_111 = arith.constant 0 : index
    %c0_112 = arith.constant 0 : index
    %c0_113 = arith.constant 0 : index
    %129 = vector.load %arg5[%c0_110, %c0_111, %c0_112, %c0_113] : memref<1x4x8x64xf32, #tpu.memory_space<vmem>>, vector<1x1x8x64xf32>
    %130 = vector.shape_cast %129 : vector<1x1x8x64xf32> to vector<8x64xf32>
    %131 = vector.shape_cast %128 : vector<8x64xf32> to vector<1x1x8x64xf32>
    tpu.vector_store %arg5[%c0_110, %c0_111, %c0_112, %c0_113], %131 {strides = array<i32>} : memref<1x4x8x64xf32, #tpu.memory_space<vmem>>, vector<1x1x8x64xf32>,
    %132 = vector.extract_strided_slice %126 {offsets = [8, 0], sizes = [8, 32], strides = [1, 1]} : vector<32x32xf32> to vector<8x32xf32>
    %133 = tpu.concatenate %132, %132 in 1 : vector<8x32xf32>, vector<8x32xf32> -> vector<8x64xf32>
    %c0_114 = arith.constant 0 : index
    %c1_115 = arith.constant 1 : index
    %c0_116 = arith.constant 0 : index
    %c0_117 = arith.constant 0 : index
    %134 = vector.load %arg5[%c0_114, %c1_115, %c0_116, %c0_117] : memref<1x4x8x64xf32, #tpu.memory_space<vmem>>, vector<1x1x8x64xf32>
    %135 = vector.shape_cast %134 : vector<1x1x8x64xf32> to vector<8x64xf32>
    %136 = vector.shape_cast %133 : vector<8x64xf32> to vector<1x1x8x64xf32>
    tpu.vector_store %arg5[%c0_114, %c1_115, %c0_116, %c0_117], %136 {strides = array<i32>} : memref<1x4x8x64xf32, #tpu.memory_space<vmem>>, vector<1x1x8x64xf32>,
    %137 = vector.extract_strided_slice %126 {offsets = [16, 0], sizes = [8, 32], strides = [1, 1]} : vector<32x32xf32> to vector<8x32xf32>
    %138 = tpu.concatenate %137, %137 in 1 : vector<8x32xf32>, vector<8x32xf32> -> vector<8x64xf32>
    %c0_118 = arith.constant 0 : index
    %c2_119 = arith.constant 2 : index
    %c0_120 = arith.constant 0 : index
    %c0_121 = arith.constant 0 : index
    %139 = vector.load %arg5[%c0_118, %c2_119, %c0_120, %c0_121] : memref<1x4x8x64xf32, #tpu.memory_space<vmem>>, vector<1x1x8x64xf32>
    %140 = vector.shape_cast %139 : vector<1x1x8x64xf32> to vector<8x64xf32>
    %141 = vector.shape_cast %138 : vector<8x64xf32> to vector<1x1x8x64xf32>
    tpu.vector_store %arg5[%c0_118, %c2_119, %c0_120, %c0_121], %141 {strides = array<i32>} : memref<1x4x8x64xf32, #tpu.memory_space<vmem>>, vector<1x1x8x64xf32>,
    %142 = vector.extract_strided_slice %126 {offsets = [24, 0], sizes = [8, 32], strides = [1, 1]} : vector<32x32xf32> to vector<8x32xf32>
    %143 = tpu.concatenate %142, %142 in 1 : vector<8x32xf32>, vector<8x32xf32> -> vector<8x64xf32>
    %c0_122 = arith.constant 0 : index
    %c3_123 = arith.constant 3 : index
    %c0_124 = arith.constant 0 : index
    %c0_125 = arith.constant 0 : index
    %144 = vector.load %arg5[%c0_122, %c3_123, %c0_124, %c0_125] : memref<1x4x8x64xf32, #tpu.memory_space<vmem>>, vector<1x1x8x64xf32>
    %145 = vector.shape_cast %144 : vector<1x1x8x64xf32> to vector<8x64xf32>
    %146 = vector.shape_cast %143 : vector<8x64xf32> to vector<1x1x8x64xf32>
    tpu.vector_store %arg5[%c0_122, %c3_123, %c0_124, %c0_125], %146 {strides = array<i32>} : memref<1x4x8x64xf32, #tpu.memory_space<vmem>>, vector<1x1x8x64xf32>,
    return
  }
  func.func @transform_0(%arg0: i32, %arg1: i32) -> (i32, i32, i32, i32) {
    %c0_i32 = arith.constant 0 : i32
    %c0_i32_0 = arith.constant 0 : i32
    %c0_i32_1 = arith.constant 0 : i32
    return %arg0, %c0_i32, %arg1, %c0_i32_0 : i32, i32, i32, i32
  }
  func.func @transform_1(%arg0: i32, %arg1: i32) -> (i32, i32) {
    %c0_i32 = arith.constant 0 : i32
    %c0_i32_0 = arith.constant 0 : i32
    %c0_i32_1 = arith.constant 0 : i32
    return %c0_i32, %c0_i32_0 : i32, i32
  }
  func.func @transform_2(%arg0: i32, %arg1: i32) -> (i32, i32) {
    %c0_i32 = arith.constant 0 : i32
    %c0_i32_0 = arith.constant 0 : i32
    %c0_i32_1 = arith.constant 0 : i32
    return %c0_i32, %c0_i32_0 : i32, i32
  }
  func.func @transform_3(%arg0: i32, %arg1: i32) -> (i32, i32, i32, i32) {
    %c0_i32 = arith.constant 0 : i32
    %c0_i32_0 = arith.constant 0 : i32
    %c0_i32_1 = arith.constant 0 : i32
    return %arg0, %c0_i32, %arg1, %c0_i32_0 : i32, i32, i32, i32
  }
}

</mosaic_0001>

<llo_original>
// kernel: tpu_custom_call.1
$region0: #{tpu_custom_call.1}
  #allocation0 [shape = 'u32[]', space=smem, size = 0x4, offset = 0x4, fixed_abs, tag = 'smem constant byte address 0x4 - core index']
  #allocation1 [shape = 'u32[144,128]{1,0:T(1,128)}', space=vmem, size = 0x12000, scoped, tag = 'internal scratch']
  %s0 = inlined_call_operand.hbm [shape: f32[2,4,16,16], index: 0, kind: input, shape index: {}]
  %s1 = inlined_call_operand.hbm [shape: f32[4,4], index: 1, kind: input, shape index: {}]
  %s2 = inlined_call_operand.hbm [shape: f32[16,32], index: 2, kind: input, shape index: {}]
  %s3 = inlined_call_operand.hbm [shape: f32[2,4,16,64], index: 3, kind: output, shape index: {}]
  %s4 = sld [smem:[#allocation0]]
  $region57: #{tpu_custom_call.1} parent=0
    _
  %s6 = ssub.s32 1, %s4
  %s7 = scalar_select 0, %s6, %s4
  $region1: #{tpu_custom_call.1} parent=0
    #allocation2 [shape = 'u8[32768]{0}', space=vmem, size = 0x8000, scoped, tag = 'input window, operand 0']
    #allocation3 [shape = 's32[2]{0}', space=sflag, size = 0x8, scoped, tag = 'scoped memory for tpu_custom_call.1']
    #allocation4 [shape = 's32[2]{0}', space=sflag, size = 0x8, scoped, tag = 'scoped memory for tpu_custom_call.1']
    #allocation5 [shape = 's32[2]{0}', space=sflag, size = 0x8, scoped, tag = 'scoped memory for tpu_custom_call.1']
    #allocation6 [shape = 'u8[2048]{0}', space=smem, size = 0x800, scoped, tag = 'input window, operand 1, single buffered']
    #allocation7 [shape = 'u8[8192]{0}', space=vmem, size = 0x2000, scoped, tag = 'input window, operand 2, single buffered']
    #allocation8 [shape = 's32[1]{0}', space=sflag, size = 0x4, scoped, tag = 'scoped memory for tpu_custom_call.1']
    #allocation9 [shape = 'u8[32768]{0}', space=vmem, size = 0x8000, scoped, tag = 'output window, operand 0']
    %8 = vsyncpa [#allocation3], 0
    %s9 = scalar_lea.sflag [#allocation3], 1
    %10 = vsyncpa %s9, 0
    %11 = vsyncpa [#allocation5], 0
    %12 = vsyncpa [#allocation8], 0
    %13 = vsyncpa [#allocation4], 0
    %s14 = scalar_lea.sflag [#allocation4], 1
    %15 = vsyncpa %s14, 0
    loop: start=0, step=1, limit=6
    $region2: #{tpu_custom_call.1} parent=1 // loop_pre_header
      _
    $region3: #{tpu_custom_call.1} parent=1 // loop_header
      %s17 = sphi 0, %s21
      %p18 = scmp.ge.s32.totalorder %s17, 6
      %s24 = sphi 0, %s36
      %s25 = sphi 0, %s32
      %s26 = sphi 0, %s24
      %s27 = sphi 0, %s25
      %s28 = sphi 0, %s26
      %s29 = sphi 0, %s27
      %s41 = sphi 0, %s43
      %s44 = sphi 0, %s41
      %s45 = sphi 0, %s44
      %s61 = sphi 0, %s45
      %s65 = sphi 0, %s65
      %s67 = sphi 0, %s65
      %s68 = sphi 0, %s67
      %s82 = sphi 0, %s68
      %s86 = sphi 0, %s86
      %s88 = sphi 0, %s86
      %s89 = sphi 0, %s88
      %s103 = sphi 0, %s89
      %s111 = sphi 0, %s113
      %s114 = sphi 0, %s111
      %s115 = sphi 0, %s114
      %s131 = sphi 0, %s115
    $region4: #{tpu_custom_call.1} parent=1 // loop_header_branch
      %20 = sbr.rel (%p18) target = $region8
    $region5: #{tpu_custom_call.1} parent=1 // loop_body
      %s22 = ssub.s32 %s17, 1
      %s23 = ssub.s32 %s17, 2
      %s30 = sadd.s32 1, %s25
      %p31 = scmp.ge.s32.totalorder %s30, 2
      %s32 = scalar_select %p31, 0, %s30
      %s33 = sadd.s32 1, %s24
      %s34 = scalar_select %p31, %s33, %s24
      %p35 = scmp.ge.s32.totalorder %s34, 2
      %s36 = scalar_select %p35, 0, %s34
      %s37 = ssub.s32 %s24, %s36
      %s38 = ssub.s32 %s25, %s32
      %s39 = sor.u32 %s37, %s38
      %p40 = scmp.eq.s32.totalorder %s39, 0
      %s42 = sadd.s32 %s41, 1
      %s43 = scalar_select %p40, %s41, %s42
      %p46 = pneg %p40
      %p47 = scmp.eq.s32.totalorder %s17, 3
      %p48 = por %p46, %p47
      %p49 = scmp.ne.s32.totalorder %s41, %s44
      %p50 = scmp.eq.s32.totalorder %s17, 0
      %p51 = por %p49, %p50
      %p52 = scmp.ne.s32.totalorder %s41, %s44
      %p53 = scmp.eq.s32.totalorder %s22, 3
      %p54 = por %p52, %p53
      %p55 = scmp.ne.s32.totalorder %s44, %s45
      %p56 = scmp.eq.s32.totalorder %s22, 0
      %p57 = por %p55, %p56
      %p58 = scmp.ne.s32.totalorder %s44, %s45
      %p59 = scmp.eq.s32.totalorder %s23, 3
      %p60 = por %p58, %p59
      %p62 = scmp.ne.s32.totalorder %s45, %s61
      %p63 = scmp.eq.s32.totalorder %s23, 0
      %p64 = por %p62, %p63
      %s66 = sadd.s32 %s65, 1
      %p69 = scmp.eq.s32.totalorder %s17, 3
      %p70 = scmp.ne.s32.totalorder %s65, %s67
      %p71 = scmp.eq.s32.totalorder %s17, 0
      %p72 = por %p70, %p71
      %p73 = scmp.ne.s32.totalorder %s65, %s67
      %p74 = scmp.eq.s32.totalorder %s22, 3
      %p75 = por %p73, %p74
      %p76 = scmp.ne.s32.totalorder %s67, %s68
      %p77 = scmp.eq.s32.totalorder %s22, 0
      %p78 = por %p76, %p77
      %p79 = scmp.ne.s32.totalorder %s67, %s68
      %p80 = scmp.eq.s32.totalorder %s23, 3
      %p81 = por %p79, %p80
      %p83 = scmp.ne.s32.totalorder %s68, %s82
      %p84 = scmp.eq.s32.totalorder %s23, 0
      %p85 = por %p83, %p84
      %s87 = sadd.s32 %s86, 1
      %p90 = scmp.eq.s32.totalorder %s17, 3
      %p91 = scmp.ne.s32.totalorder %s86, %s88
      %p92 = scmp.eq.s32.totalorder %s17, 0
      %p93 = por %p91, %p92
      %p94 = scmp.ne.s32.totalorder %s86, %s88
      %p95 = scmp.eq.s32.totalorder %s22, 3
      %p96 = por %p94, %p95
      %p97 = scmp.ne.s32.totalorder %s88, %s89
      %p98 = scmp.eq.s32.totalorder %s22, 0
      %p99 = por %p97, %p98
      %p100 = scmp.ne.s32.totalorder %s88, %s89
      %p101 = scmp.eq.s32.totalorder %s23, 3
      %p102 = por %p100, %p101
      %p104 = scmp.ne.s32.totalorder %s89, %s103
      %p105 = scmp.eq.s32.totalorder %s23, 0
      %p106 = por %p104, %p105
      %s107 = ssub.s32 %s24, %s36
      %s108 = ssub.s32 %s25, %s32
      %s109 = sor.u32 %s107, %s108
      %p110 = scmp.eq.s32.totalorder %s109, 0
      %s112 = sadd.s32 %s111, 1
      %s113 = scalar_select %p110, %s111, %s112
      %p116 = pneg %p110
      %p117 = scmp.eq.s32.totalorder %s17, 3
      %p118 = por %p116, %p117
      %p119 = scmp.ne.s32.totalorder %s111, %s114
      %p120 = scmp.eq.s32.totalorder %s17, 0
      %p121 = por %p119, %p120
      %p122 = scmp.ne.s32.totalorder %s111, %s114
      %p123 = scmp.eq.s32.totalorder %s22, 3
      %p124 = por %p122, %p123
      %p125 = scmp.ne.s32.totalorder %s114, %s115
      %p126 = scmp.eq.s32.totalorder %s22, 0
      %p127 = por %p125, %p126
      %p128 = scmp.ne.s32.totalorder %s114, %s115
      %p129 = scmp.eq.s32.totalorder %s23, 3
      %p130 = por %p128, %p129
      %p132 = scmp.ne.s32.totalorder %s115, %s131
      %p133 = scmp.eq.s32.totalorder %s23, 0
      %p134 = por %p132, %p133
      %p135 = scmp.le.s32.totalorder 1, %s17
      %p136 = scmp.lt.s32.totalorder %s17, 5
      %p137 = pnand %p135, %p136
      %p138 = pneg %p137
      // Predicated region
      $region9: #{tpu_custom_call.1} parent=5 // pred_check
        _
      $region10: #{tpu_custom_call.1} parent=5 // pred_check_branch
        %140 = sbr.rel (%p137) target = $region12
      $region11: #{tpu_custom_call.1} parent=5 // pred_region
        %s141 = ssub.s32 %s17, 1
        // Predicated region
        $region13: #{tpu_custom_call.1} parent=11 // pred_check
          %p142 = pneg %p78
        $region14: #{tpu_custom_call.1} parent=11 // pred_check_branch
          %144 = sbr.rel (%p142) target = $region16
        $region15: #{tpu_custom_call.1} parent=11 // pred_region
          %s146 = ssub.s32 64, 64
          %147 = vsyncadd [#allocation5], %s146
          %150 = dma.hbm_to_smem %s1, 64, [#allocation6], [#allocation5]
        $region16: #{tpu_custom_call.1} parent=11 // pred_fallthru
          _
        // Predicated region
        $region17: #{tpu_custom_call.1} parent=11 // pred_check
          %p151 = pneg %p99
        $region18: #{tpu_custom_call.1} parent=11 // pred_check_branch
          %153 = sbr.rel (%p151) target = $region20
        $region19: #{tpu_custom_call.1} parent=11 // pred_region
          %s155 = ssub.s32 256, 256
          %156 = vsyncadd [#allocation8], %s155
          %s157 = sshll.u32 [#allocation7], 4
          %s158 = int_to_ptr.vmem [resolvable:$true] %s157
          %163 = dma.hbm_to_vmem [thread:$0]  %s2, 256, %s158, [#allocation8], 128, 128, 8
        $region20: #{tpu_custom_call.1} parent=11 // pred_fallthru
          _
      $region12: #{tpu_custom_call.1} parent=5 // pred_fallthru
        _
      %p164 = scmp.lt.s32.totalorder %s17, 4
      // Predicated region
      $region21: #{tpu_custom_call.1} parent=5 // pred_check
        %p165 = pneg %p164
      $region22: #{tpu_custom_call.1} parent=5 // pred_check_branch
        %167 = sbr.rel (%p165) target = $region24
      $region23: #{tpu_custom_call.1} parent=5 // pred_region
        // Predicated region
        $region25: #{tpu_custom_call.1} parent=23 // pred_check
          %p168 = pneg %p51
        $region26: #{tpu_custom_call.1} parent=23 // pred_check_branch
          %170 = sbr.rel (%p168) target = $region28
        $region27: #{tpu_custom_call.1} parent=23 // pred_region
          %s171 = sand.u32 %s41, 1
          %s172 = scalar_lea.sflag [#allocation3], %s171
          %s173 = sand.u32 %s41, 1
          %s174 = smul.addr %s173, 32
          %s175 = scalar_lea.vmem [#allocation2], %s174
          %s177 = ssub.s32 512, 512
          %178 = vsyncadd %s172, %s177
          %s179 = smul.addr %s24, 8
          %s180 = sadd.s32 %s25, %s179
          %s181 = smul.addr %s180, 128
          %s182 = scalar_lea.hbm %s0, %s181
          %s183 = sshll.u32 %s175, 4
          %s184 = int_to_ptr.vmem [resolvable:$true] %s183
          %189 = dma.hbm_to_vmem [thread:$0]  %s182, 512, %s184, %s172, 256, 128, 8
        $region28: #{tpu_custom_call.1} parent=23 // pred_fallthru
          _
      $region24: #{tpu_custom_call.1} parent=5 // pred_fallthru
        _
      %p190 = scmp.le.s32.totalorder 1, %s17
      %p191 = scmp.lt.s32.totalorder %s17, 5
      %p192 = pnand %p190, %p191
      %p193 = pneg %p192
      // Predicated region
      $region29: #{tpu_custom_call.1} parent=5 // pred_check
        _
      $region30: #{tpu_custom_call.1} parent=5 // pred_check_branch
        %195 = sbr.rel (%p192) target = $region32
      $region31: #{tpu_custom_call.1} parent=5 // pred_region
        %s196 = ssub.s32 %s17, 1
        %s197 = sand.u32 %s44, 1
        %s198 = scalar_lea.sflag [#allocation3], %s197
        %s199 = sand.u32 %s44, 1
        %s200 = smul.addr %s199, 32
        %s201 = scalar_lea.vmem [#allocation2], %s200
        // Predicated region
        $region33: #{tpu_custom_call.1} parent=31 // pred_check
          %p202 = pneg %p57
        $region34: #{tpu_custom_call.1} parent=31 // pred_check_branch
          %204 = sbr.rel (%p202) target = $region36
        $region35: #{tpu_custom_call.1} parent=31 // pred_region
          %205 = dma.done %s198, 512
        $region36: #{tpu_custom_call.1} parent=31 // pred_fallthru
          _
        // Predicated region
        $region37: #{tpu_custom_call.1} parent=31 // pred_check
          %p206 = pneg %p78
        $region38: #{tpu_custom_call.1} parent=31 // pred_check_branch
          %208 = sbr.rel (%p206) target = $region40
        $region39: #{tpu_custom_call.1} parent=31 // pred_region
          %209 = dma.done [#allocation5], 64
        $region40: #{tpu_custom_call.1} parent=31 // pred_fallthru
          _
        // Predicated region
        $region41: #{tpu_custom_call.1} parent=31 // pred_check
          %p210 = pneg %p99
        $region42: #{tpu_custom_call.1} parent=31 // pred_check_branch
          %212 = sbr.rel (%p210) target = $region44
        $region43: #{tpu_custom_call.1} parent=31 // pred_region
          %213 = dma.done [#allocation8], 256
        $region44: #{tpu_custom_call.1} parent=31 // pred_fallthru
          _
        %214 = sfence
        %s215 = sand.u32 %s44, 1
        %s216 = scalar_lea.sflag [#allocation3], %s215
        %s217 = sand.u32 %s44, 1
        %s218 = smul.addr %s217, 32
        %s219 = scalar_lea.vmem [#allocation2], %s218
        %p220 = pneg %p57
        %p221 = pneg %p54
        %p222 = pneg %p78
        %p223 = pneg %p75
        %p224 = pneg %p99
        %p225 = pneg %p96
        %p226 = pneg %p127
        %p227 = pneg %p124
        %s228 = sand.u32 %s114, 1
        %s229 = scalar_lea.sflag [#allocation4], %s228
        %s230 = sand.u32 %s114, 1
        %s231 = smul.addr %s230, 32
        %s232 = scalar_lea.vmem [#allocation9], %s231
        %s233 = sld [smem:[#allocation6]]
        %v234 = vld [vmem:[%s201] sm:$0xff]
        %v235 = vmax.f32 %v234, 0.0
        %v236 = vstv %s233
        %v237 = vmul.f32 %v236, %v235
        %s238 = sld [smem:[#allocation6 + $0x80]]
        %s239 = scalar_lea.vmem %s201, 8 [#allocation2]
        %v240 = vld [vmem:[%s239] sm:$0xff]
        %v241 = vmax.f32 %v240, 0.0
        %v242 = vstv %s238
        %v243 = vmul.f32 %v242, %v241
        %v244 = vadd.f32 %v237, %v243
        %s245 = sld [smem:[#allocation6 + $0x100]]
        %s246 = scalar_lea.vmem %s201, 16 [#allocation2]
        %v247 = vld [vmem:[%s246] sm:$0xff]
        %v248 = vmax.f32 %v247, 0.0
        %v249 = vstv %s245
        %v250 = vmul.f32 %v249, %v248
        %v251 = vadd.f32 %v244, %v250
        %s252 = sld [smem:[#allocation6 + $0x180]]
        %s253 = scalar_lea.vmem %s201, 24 [#allocation2]
        %v254 = vld [vmem:[%s253] sm:$0xff]
        %v255 = vmax.f32 %v254, 0.0
        %v256 = vstv %s252
        %v257 = vmul.f32 %v256, %v255
        %v258 = vadd.f32 %v251, %v257
        %s259 = sld [smem:[#allocation6 + $0x1]]
        %v260 = vstv %s259
        %v261 = vmul.f32 %v260, %v235
        %s262 = sld [smem:[#allocation6 + $0x81]]
        %v263 = vstv %s262
        %v264 = vmul.f32 %v263, %v241
        %v265 = vadd.f32 %v261, %v264
        %s266 = sld [smem:[#allocation6 + $0x101]]
        %v267 = vstv %s266
        %v268 = vmul.f32 %v267, %v248
        %v269 = vadd.f32 %v265, %v268
        %s270 = sld [smem:[#allocation6 + $0x181]]
        %v271 = vstv %s270
        %v272 = vmul.f32 %v271, %v255
        %v273 = vadd.f32 %v269, %v272
        %s274 = sld [smem:[#allocation6 + $0x2]]
        %v275 = vstv %s274
        %v276 = vmul.f32 %v275, %v235
        %s277 = sld [smem:[#allocation6 + $0x82]]
        %v278 = vstv %s277
        %v279 = vmul.f32 %v278, %v241
        %v280 = vadd.f32 %v276, %v279
        %s281 = sld [smem:[#allocation6 + $0x102]]
        %v282 = vstv %s281
        %v283 = vmul.f32 %v282, %v248
        %v284 = vadd.f32 %v280, %v283
        %s285 = sld [smem:[#allocation6 + $0x182]]
        %v286 = vstv %s285
        %v287 = vmul.f32 %v286, %v255
        %v288 = vadd.f32 %v284, %v287
        %s289 = sld [smem:[#allocation6 + $0x3]]
        %v290 = vstv %s289
        %v291 = vmul.f32 %v290, %v235
        %s292 = sld [smem:[#allocation6 + $0x83]]
        %v293 = vstv %s292
        %v294 = vmul.f32 %v293, %v241
        %v295 = vadd.f32 %v291, %v294
        %s296 = sld [smem:[#allocation6 + $0x103]]
        %v297 = vstv %s296
        %v298 = vmul.f32 %v297, %v248
        %v299 = vadd.f32 %v295, %v298
        %s300 = sld [smem:[#allocation6 + $0x183]]
        %v301 = vstv %s300
        %v302 = vmul.f32 %v301, %v255
        %v303 = vadd.f32 %v299, %v302
        %v304 = vld [vmem:[#allocation7] sm:$0xff]
        %v305 = vld [vmem:[#allocation7 + $0x8] sm:$0xff]
        %vm306 = vcmask 130048
        %v308 = vsel %vm306, %v258, 0
        %v311 = vsel %vm306, %v273, 0
        %v314 = vsel %vm306, %v288, 0
        %v317 = vsel %vm306, %v303, 0
        %319 = vmatprep.subr.mxu0 0.0
        %320 = vmatpush1.msra.mxu0 %v304
        %321 = vmatprep.subr.mxu0 0.0
        %322 = vmatpush1.msra.mxu0 %v305
        %323 = vmatprep.subr.mxu0 0.0
        %324 = vmatpush1.msra.mxu0 0.0
        %325 = vmatprep.subr.mxu0 0.0
        %326 = vmatpush1.msra.mxu0 0.0
        %327 = vmatprep.subr.mxu0 0.0
        %328 = vmatpush1.msra.mxu0 0.0
        %329 = vmatprep.subr.mxu0 0.0
        %330 = vmatpush1.msra.mxu0 0.0
        %331 = vmatprep.subr.mxu0 0.0
        %332 = vmatpush1.msra.mxu0 0.0
        %333 = vmatprep.subr.mxu0 0.0
        %334 = vmatpush1.msra.mxu0 0.0
        %335 = vmatprep.subr.mxu0 0.0
        %336 = vmatpush1.msra.mxu0 0.0
        %337 = vmatprep.subr.mxu0 0.0
        %338 = vmatpush1.msra.mxu0 0.0
        %339 = vmatprep.subr.mxu0 0.0
        %340 = vmatpush1.msra.mxu0 0.0
        %341 = vmatprep.subr.mxu0 0.0
        %342 = vmatpush1.msra.mxu0 0.0
        %343 = vmatprep.subr.mxu0 0.0
        %344 = vmatpush1.msra.mxu0 0.0
        %345 = vmatprep.subr.mxu0 0.0
        %346 = vmatpush1.msra.mxu0 0.0
        %347 = vmatprep.subr.mxu0 0.0
        %348 = vmatpush1.msra.mxu0 0.0
        %349 = vmatprep.subr.mxu0 0.0
        %350 = vmatpush1.msra.mxu0 0.0
        %351 = vmatprep.subr.mxu0 0.0
        %352 = vmatpush1.msra.mxu0 0.0
        %353 = vmatprep.subr.mxu0 0.0
        %354 = vmatpush1.msra.mxu0 0.0
        %355 = vmatprep.subr.mxu0 0.0
        %356 = vmatpush1.msra.mxu0 0.0
        %357 = vmatprep.subr.mxu0 0.0
        %358 = vmatpush1.msra.mxu0 0.0
        %359 = vmatprep.subr.mxu0 0.0
        %360 = vmatpush1.msra.mxu0 0.0
        %361 = vmatprep.subr.mxu0 0.0
        %362 = vmatpush1.msra.mxu0 0.0
        %363 = vmatprep.subr.mxu0 0.0
        %364 = vmatpush1.msra.mxu0 0.0
        %365 = vmatprep.subr.mxu0 0.0
        %366 = vmatpush1.msra.mxu0 0.0
        %367 = vmatprep.subr.mxu0 0.0
        %368 = vmatpush1.msra.mxu0 0.0
        %369 = vmatprep.subr.mxu0 0.0
        %370 = vmatpush1.msra.mxu0 0.0
        %371 = vmatprep.subr.mxu0 0.0
        %372 = vmatpush1.msra.mxu0 0.0
        %373 = vmatprep.subr.mxu0 0.0
        %374 = vmatpush1.msra.mxu0 0.0
        %375 = vmatprep.subr.mxu0 0.0
        %376 = vmatpush1.msra.mxu0 0.0
        %377 = vmatprep.subr.mxu0 0.0
        %378 = vmatpush1.msra.mxu0 0.0
        %379 = vmatprep.subr.mxu0 0.0
        %380 = vmatpush1.msra.mxu0 0.0
        %381 = vmatprep.subr.mxu0 0.0
        %382 = vmatpush1.msra.mxu0 0.0
        %383 = vmatprep.mubr.f32.mxu0 0.0
        %384 = vmatmul.mubr.f32.gmra.mrb[0].mxu0 %v308
        %v385 = vpop.f32.mrb[0].mxu0
        %v386 = vadd.f32 0.0, %v385
        %v387 = vpop.f32.mrb[0].mxu0
        %388 = vmatprep.mubr.f32.mxu0 0.0
        %389 = vmatmul.mubr.f32.gmra.mrb[0].mxu0 %v311
        %v390 = vpop.f32.mrb[0].mxu0
        %v391 = vadd.f32 0.0, %v390
        %v392 = vpop.f32.mrb[0].mxu0
        %393 = vmatprep.mubr.f32.mxu0 0.0
        %394 = vmatmul.mubr.f32.gmra.mrb[0].mxu0 %v314
        %v395 = vpop.f32.mrb[0].mxu0
        %v396 = vadd.f32 0.0, %v395
        %v397 = vpop.f32.mrb[0].mxu0
        %398 = vmatprep.mubr.f32.mxu0 0.0
        %399 = vmatmul.mubr.f32.gmra.mrb[0].mxu0 %v317
        %v400 = vpop.f32.mrb[0].mxu0
        %v401 = vadd.f32 0.0, %v400
        %v402 = vpop.f32.mrb[0].mxu0
        %403 = vdwg.mxu0
        %405 = vrot.lane.b32.xlu0 %v386, 32
        %v406 = vpop.permute.xlu0 %405
        %vm408 = vcmask 261120
        %v409 = vsel %vm408, %v386, %v406
        %vm410 = vcmask 523264
        %411 = vst.msk [vmem:[%s232] sm:$0xff] %vm410, %v409
        %413 = vrot.lane.b32.xlu0 %v391, 32
        %v414 = vpop.permute.xlu0 %413
        %v416 = vsel %vm408, %v391, %v414
        %s417 = scalar_lea.vmem %s232, 8 [#allocation9]
        %418 = vst.msk [vmem:[%s417] sm:$0xff] %vm410, %v416
        %420 = vrot.lane.b32.xlu0 %v396, 32
        %v421 = vpop.permute.xlu0 %420
        %v423 = vsel %vm408, %v396, %v421
        %s424 = scalar_lea.vmem %s232, 16 [#allocation9]
        %425 = vst.msk [vmem:[%s424] sm:$0xff] %vm410, %v423
        %427 = vrot.lane.b32.xlu0 %v401, 32
        %v428 = vpop.permute.xlu0 %427
        %v430 = vsel %vm408, %v401, %v428
        %s431 = scalar_lea.vmem %s232, 24 [#allocation9]
        %432 = vst.msk [vmem:[%s431] sm:$0xff] %vm410, %v430
        %s433 = sand.u32 %s114, 1
        %s434 = scalar_lea.sflag [#allocation4], %s433
        %s435 = sand.u32 %s114, 1
        %s436 = smul.addr %s435, 32
        %s437 = scalar_lea.vmem [#allocation9], %s436
        // Predicated region
        $region45: #{tpu_custom_call.1} parent=31 // pred_check
          %p438 = pneg %p124
        $region46: #{tpu_custom_call.1} parent=31 // pred_check_branch
          %440 = sbr.rel (%p438) target = $region48
        $region47: #{tpu_custom_call.1} parent=31 // pred_region
          %s442 = ssub.s32 512, 512
          %443 = vsyncadd %s434, %s442
          %s444 = smul.addr %s26, 8
          %s445 = sadd.s32 %s27, %s444
          %s446 = smul.addr %s445, 128
          %s447 = scalar_lea.hbm %s3, %s446
          %s448 = sshll.u32 %s437, 4
          %s449 = int_to_ptr.vmem [resolvable:$true] %s448
          %454 = dma.vmem_to_hbm [thread:$0]  %s449, 512, %s447, %s434, 128, 256, 8
        $region48: #{tpu_custom_call.1} parent=31 // pred_fallthru
          _
      $region32: #{tpu_custom_call.1} parent=5 // pred_fallthru
        _
      %p455 = scmp.le.s32.totalorder 2, %s17
      // Predicated region
      $region49: #{tpu_custom_call.1} parent=5 // pred_check
        %p456 = pneg %p455
      $region50: #{tpu_custom_call.1} parent=5 // pred_check_branch
        %458 = sbr.rel (%p456) target = $region52
      $region51: #{tpu_custom_call.1} parent=5 // pred_region
        %s459 = ssub.s32 %s17, 2
        // Predicated region
        $region53: #{tpu_custom_call.1} parent=51 // pred_check
          %p460 = pneg %p130
        $region54: #{tpu_custom_call.1} parent=51 // pred_check_branch
          %462 = sbr.rel (%p460) target = $region56
        $region55: #{tpu_custom_call.1} parent=51 // pred_region
          %s463 = sand.u32 %s115, 1
          %s464 = scalar_lea.sflag [#allocation4], %s463
          %s465 = sand.u32 %s115, 1
          %s466 = smul.addr %s465, 32
          %s467 = scalar_lea.vmem [#allocation9], %s466
          %468 = dma.done %s464, 512
        $region56: #{tpu_custom_call.1} parent=51 // pred_fallthru
          _
      $region52: #{tpu_custom_call.1} parent=5 // pred_fallthru
        _
    $region6: #{tpu_custom_call.1} parent=1 // loop_footer
      %s21 = sadd.s32 1, %s17
    $region7: #{tpu_custom_call.1} parent=1 // loop_footer_branch
      %16 = sbr.rel target = $region3
    $region8: #{tpu_custom_call.1} parent=1 // loop_exit
      _
    %469 = vsyncpa [#allocation3], 1
    %s470 = scalar_lea.sflag [#allocation3], 1
    %471 = vsyncpa %s470, 1
    %472 = vsyncpa [#allocation8], 1
    %473 = vsyncpa [#allocation4], 1
    %s474 = scalar_lea.sflag [#allocation4], 1
    %475 = vsyncpa %s474, 1
    %476 = vsyncpa [#allocation5], 1
    %s477 = scalar_lea.sflag [#allocation5], 1
    %478 = vsyncpa %s477, 1

</llo_original>
